<compile_context>
chip_gen: v7x
topology: tpu7x:2x2x1
jax: 0.10.0
libtpu: 0.0.40
codegen_flags: <defaults>
</compile_context>

<pallas_src>
import functools
import math

import jax
import jax.numpy as jnp
from jax.experimental import pallas as pl
from jax.experimental.pallas import tpu as pltpu


def _round_up(n, m):
    return ((n + m - 1) // m) * m


# --------------------------------------------------------------------------
# Pallas kernel: fused  Linear+ReLU -> (collapsed NoisyLinear stack)
# --------------------------------------------------------------------------
def _fused_forward_kernel(x_ref, c_ref, o_ref, *,
                          in_f, lane, off_b0, off_w12, off_b12):
    x = x_ref[...]                                   # (tb, IN) compute dtype

    # Static, 8/16-aligned slices of the single packed constants array.
    w0 = c_ref[0:in_f, :]                            # (IN,   LANE)
    b0 = c_ref[off_b0:off_b0 + 1, :]                 # (1,    LANE)
    w12 = c_ref[off_w12:off_w12 + lane, :]           # (LANE, LANE)
    b12 = c_ref[off_b12:off_b12 + 1, :]              # (1,    LANE)

    # Layer 0: base model = Linear + ReLU.  Bias add / ReLU on f32 accumulators.
    h = jnp.dot(x, w0, preferred_element_type=jnp.float32)
    h = jnp.maximum(h + b0.astype(jnp.float32), 0.0)

    # Collapsed NoisyLinear stack (noise + both layers folded offline).
    y = jnp.dot(h.astype(w12.dtype), w12, preferred_element_type=jnp.float32)
    o_ref[...] = (y + b12.astype(jnp.float32)).astype(o_ref.dtype)


def _pick_batch_tile(B):
    # Large tiles amortize the ~0.35 us per-grid-step cost; keep >= 2 grid
    # steps when the batch allows it so ("parallel",) can shard the grid
    # across both TensorCores on v7x.
    for tb in (4096, 2048, 1024, 512, 256, 128, 64, 32, 16, 8):
        if B % tb == 0 and B // tb >= 2:
            return tb
    # TODO(synk): handle ragged *large* batches with a padded remainder tile.
    return B  # tiny or ragged batch: single full-array block


def fused_forward(x, prep):
    """Run the fused forward pass.  `prep` comes from prepare_params()."""
    consts = prep["consts"]
    meta = prep["meta"]
    B = x.shape[0]
    IN, OUT, LANE = meta["in_f"], meta["out_f"], meta["lane"]
    assert x.shape[1] == IN

    # Stream the only per-step HBM operand in the compute dtype (bf16 by
    # default -> half the read bytes).
    x = x.astype(consts.dtype)

    tb = _pick_batch_tile(B)
    grid = (B // tb,)

    kernel = functools.partial(
        _fused_forward_kernel,
        in_f=IN, lane=LANE,
        off_b0=meta["off_b0"], off_w12=meta["off_w12"], off_b12=meta["off_b12"],
    )

    out_padded = pl.pallas_call(
        kernel,
        out_shape=jax.ShapeDtypeStruct((B, LANE), jnp.float32),
        grid_spec=pltpu.PrefetchScalarGridSpec(
            num_scalar_prefetch=0,
            grid=grid,
            in_specs=[
                pl.BlockSpec((tb, IN), lambda i: (i, 0)),        # x: tiled on batch
                pl.BlockSpec(consts.shape, lambda i: (0, 0)),    # packed constants, resident
            ],
            out_specs=pl.BlockSpec((tb, LANE), lambda i: (i, 0)),  # lane-dense (128-wide)
        ),
        compiler_params=pltpu.CompilerParams(
            dimension_semantics=("parallel",),   # megacore sharding of batch tiles
        ),
    )(x, consts)

    # Drop the lane padding added for dense stores.
    return out_padded[:, :OUT]


# --------------------------------------------------------------------------
# One-time parameter preparation (outside the per-forward hot path)
# --------------------------------------------------------------------------
def prepare_params(params, compute_dtype=jnp.bfloat16):
    """Fold noise, collapse the noisy stack, pad to lane-dense, pack constants.

    Done once per noise draw (in f32); the forward kernel only sees one fused,
    packed constant array.
    """
    w0 = params["w0"]            # (HID, IN)
    b0 = params["b0"]            # (HID,)
    HID, IN = w0.shape

    # Fold factorized noise into effective weights (f32).
    effs = []
    for lyr in params["noisy"]:
        w_eff = lyr["w_mu"] + lyr["w_sigma"] * lyr["w_eps"]   # (out, in)
        b_eff = lyr["b_mu"] + lyr["b_sigma"] * lyr["b_eps"]   # (out,)
        effs.append((w_eff, b_eff))

    # Collapse the back-to-back noisy linears (no nonlinearity between them)
    # into a single affine map: y = x @ W.T + b.
    W, b = effs[0]
    for w_i, b_i in effs[1:]:
        W = w_i @ W
        b = w_i @ b + b_i
    OUT = W.shape[0]

    # Lane-dense layout: pad hidden/output feature axes to a 128 multiple and
    # pack everything into one (rows, LANE) array with 16-aligned row sections.
    LANE = _round_up(max(HID, OUT), 128)
    IN_P = _round_up(IN, 16)
    off_b0 = IN_P
    off_w12 = IN_P + 16
    off_b12 = off_w12 + LANE
    rows = off_b12 + 16

    consts = jnp.zeros((rows, LANE), jnp.float32)
    consts = consts.at[:IN, :HID].set(w0.T)                       # (IN, HID)
    consts = consts.at[off_b0, :HID].set(b0)
    consts = consts.at[off_w12:off_w12 + HID, :OUT].set(W.T)      # (HID, OUT)
    consts = consts.at[off_b12, :OUT].set(b)
    consts = consts.astype(compute_dtype)

    meta = dict(in_f=IN, hid=HID, out_f=OUT, lane=LANE,
                off_b0=off_b0, off_w12=off_w12, off_b12=off_b12)
    return dict(consts=consts, meta=meta)


# --------------------------------------------------------------------------
# Parameter / noise construction (plain JAX glue, deterministic)
# --------------------------------------------------------------------------
def init_linear(key, in_f, out_f):
    kw, kb = jax.random.split(key)
    bound = 1.0 / math.sqrt(in_f)
    w = jax.random.uniform(kw, (out_f, in_f), jnp.float32, -bound, bound)
    b = jax.random.uniform(kb, (out_f,), jnp.float32, -bound, bound)
    return w, b


def init_noisy_linear(key, in_f, out_f, std_init=0.5):
    kw, kb = jax.random.split(key)
    mu_range = 1.0 / math.sqrt(in_f)
    w_mu = jax.random.uniform(kw, (out_f, in_f), jnp.float32, -mu_range, mu_range)
    b_mu = jax.random.uniform(kb, (out_f,), jnp.float32, -mu_range, mu_range)
    w_sigma = jnp.full((out_f, in_f), std_init / math.sqrt(in_f), jnp.float32)
    b_sigma = jnp.full((out_f,), std_init / math.sqrt(out_f), jnp.float32)
    return w_mu, w_sigma, b_mu, b_sigma


def factorized_noise(key, in_f, out_f):
    # f(z) = sign(z) * sqrt(|z|); factorized Gaussian noise (NoisyNet).
    ki, ko = jax.random.split(key)
    eps_in = jax.random.normal(ki, (in_f,), jnp.float32)
    eps_out = jax.random.normal(ko, (out_f,), jnp.float32)
    f = lambda z: jnp.sign(z) * jnp.sqrt(jnp.abs(z))
    f_in, f_out = f(eps_in), f(eps_out)
    w_eps = jnp.outer(f_out, f_in)          # (out, in)
    b_eps = f_out                           # (out,)
    return w_eps, b_eps


def model_with_noisy_layers_forward(x, prepared_params):
    # model(x) -> noisy_layers(x), all inside one fused Pallas kernel.
    return fused_forward(x, prepared_params)


# --------------------------------------------------------------------------
if __name__ == "__main__":
    key = jax.random.PRNGKey(0)
    k_x, k_l0, k_n1, k_n2, k_e1, k_e2 = jax.random.split(key, 6)

    B, IN, HID, OUT = 8, 32, 64, 16
    x = jax.random.normal(k_x, (B, IN), jnp.float32)

    w0, b0 = init_linear(k_l0, IN, HID)

    def make_noisy(kp, ke, in_f, out_f):
        w_mu, w_sigma, b_mu, b_sigma = init_noisy_linear(kp, in_f, out_f)
        w_eps, b_eps = factorized_noise(ke, in_f, out_f)
        return dict(w_mu=w_mu, w_sigma=w_sigma, w_eps=w_eps,
                    b_mu=b_mu, b_sigma=b_sigma, b_eps=b_eps)

    params = dict(
        w0=w0, b0=b0,
        noisy=[make_noisy(k_n1, k_e1, HID, HID),
               make_noisy(k_n2, k_e2, HID, OUT)],
    )

    # One-time (per noise draw) preparation: fuse noise, collapse the noisy
    # stack, pad + pack constants.  Hot path is a single pallas_call.
    prep = prepare_params(params, compute_dtype=jnp.bfloat16)
    jax.block_until_ready(prep["consts"])

    out = model_with_noisy_layers_forward(x, prep)
    out = jax.block_until_ready(out)

    # Pure-JAX f32 reference against the original (unfused) parameterization.
    h_ref = jnp.maximum(x @ w0.T + b0, 0.0)
    for lyr in params["noisy"]:
        w_eff = lyr["w_mu"] + lyr["w_sigma"] * lyr["w_eps"]
        b_eff = lyr["b_mu"] + lyr["b_sigma"] * lyr["b_eps"]
        h_ref = h_ref @ w_eff.T + b_eff

    assert out.shape == (B, OUT)
    # bf16 streaming + the layer collapse change rounding slightly; bound the
    # error accordingly (values are O(1), bf16 path error is O(1e-3..1e-2)).
    assert jnp.allclose(out, h_ref, atol=5e-2, rtol=5e-2), (
        float(jnp.max(jnp.abs(out - h_ref))))

    print("KERNEL_OK")
</pallas_src>

<mosaic_0001>
module attributes {stable_mosaic.version = 11 : i64} {
  func.func @_fused_forward_kernel(%arg0: i32, %arg1: memref<8x32xbf16, #tpu.memory_space<vmem>>, %arg2: memref<192x128xbf16, #tpu.memory_space<vmem>>, %arg3: memref<8x128xf32, #tpu.memory_space<vmem>>) attributes {dimension_semantics = [#tpu.dimension_semantics<parallel>], iteration_bounds = array<i64: 1>, scalar_prefetch = 0 : i64, scratch_operands = 0 : i64, tpu.core_type = #tpu.core_type<tc>, window_params = [{transform_indices = @transform_0, window_bounds = array<i64: 8, 32>}, {pipeline_mode = #tpu.pipeline_mode<synchronous>, transform_indices = @transform_1, window_bounds = array<i64: 192, 128>}, {transform_indices = @transform_2, window_bounds = array<i64: 8, 128>}]} {
    %c0 = arith.constant 0 : index
    %c0_0 = arith.constant 0 : index
    %0 = vector.load %arg1[%c0, %c0_0] : memref<8x32xbf16, #tpu.memory_space<vmem>>, vector<8x32xbf16>
    %c0_1 = arith.constant 0 : index
    %c0_2 = arith.constant 0 : index
    %1 = vector.load %arg2[%c0_1, %c0_2] : memref<192x128xbf16, #tpu.memory_space<vmem>>, vector<32x128xbf16>
    %c32 = arith.constant 32 : index
    %c0_3 = arith.constant 0 : index
    %2 = vector.load %arg2[%c32, %c0_3] : memref<192x128xbf16, #tpu.memory_space<vmem>>, vector<1x128xbf16>
    %c48 = arith.constant 48 : index
    %c0_4 = arith.constant 0 : index
    %3 = vector.load %arg2[%c48, %c0_4] : memref<192x128xbf16, #tpu.memory_space<vmem>>, vector<128x128xbf16>
    %c176 = arith.constant 176 : index
    %c0_5 = arith.constant 0 : index
    %4 = vector.load %arg2[%c176, %c0_5] : memref<192x128xbf16, #tpu.memory_space<vmem>>, vector<1x128xbf16>
    %cst = arith.constant dense<0.000000e+00> : vector<8x128xf32>
    %5 = tpu.matmul %0, %1, %cst {dimension_numbers = #tpu.dot_dimension_numbers<[1], [0], [0], [1], [0, 0, 1, 1], [], []>} : vector<8x32xbf16>, vector<32x128xbf16>, vector<8x128xf32> -> vector<8x128xf32>
    %6 = arith.extf %2 : vector<1x128xbf16> to vector<1x128xf32>
    %7 = vector.broadcast %6 : vector<1x128xf32> to vector<8x128xf32>
    %8 = arith.addf %5, %7 : vector<8x128xf32>
    %cst_6 = arith.constant 0.000000e+00 : f32
    %9 = vector.broadcast %cst_6 : f32 to vector<8x128xf32>
    %10 = arith.maximumf %8, %9 : vector<8x128xf32>
    %11 = arith.truncf %10 : vector<8x128xf32> to vector<8x128xbf16>
    %cst_7 = arith.constant dense<0.000000e+00> : vector<8x128xf32>
    %12 = tpu.matmul %11, %3, %cst_7 {dimension_numbers = #tpu.dot_dimension_numbers<[1], [0], [0], [1], [0, 0, 1, 1], [], []>} : vector<8x128xbf16>, vector<128x128xbf16>, vector<8x128xf32> -> vector<8x128xf32>
    %13 = arith.extf %4 : vector<1x128xbf16> to vector<1x128xf32>
    %14 = vector.broadcast %13 : vector<1x128xf32> to vector<8x128xf32>
    %15 = arith.addf %12, %14 : vector<8x128xf32>
    %c0_8 = arith.constant 0 : index
    %c0_9 = arith.constant 0 : index
    %16 = vector.load %arg3[%c0_8, %c0_9] : memref<8x128xf32, #tpu.memory_space<vmem>>, vector<8x128xf32>
    tpu.vector_store %arg3[%c0_8, %c0_9], %15 {strides = array<i32>} : memref<8x128xf32, #tpu.memory_space<vmem>>, vector<8x128xf32>,
    return
  }
  func.func @transform_0(%arg0: i32) -> (i32, i32) {
    %c0_i32 = arith.constant 0 : i32
    %c0_i32_0 = arith.constant 0 : i32
    return %arg0, %c0_i32 : i32, i32
  }
  func.func @transform_1(%arg0: i32) -> (i32, i32) {
    %c0_i32 = arith.constant 0 : i32
    %c0_i32_0 = arith.constant 0 : i32
    %c0_i32_1 = arith.constant 0 : i32
    return %c0_i32, %c0_i32_0 : i32, i32
  }
  func.func @transform_2(%arg0: i32) -> (i32, i32) {
    %c0_i32 = arith.constant 0 : i32
    %c0_i32_0 = arith.constant 0 : i32
    return %arg0, %c0_i32 : i32, i32
  }
}

</mosaic_0001>

<llo_original>
// kernel: tpu_custom_call.1
$region0: #{tpu_custom_call.1}
  #allocation0 [shape = 'u32[]', space=smem, size = 0x4, offset = 0x4, fixed_abs, tag = 'smem constant byte address 0x4 - core index']
  #allocation1 [shape = 'u32[144,128]{1,0:T(1,128)}', space=vmem, size = 0x12000, scoped, tag = 'internal scratch']
  %s0 = inlined_call_operand.hbm [shape: bf16[8,32], index: 0, kind: input, shape index: {}]
  %s1 = inlined_call_operand.hbm [shape: bf16[192,128], index: 1, kind: input, shape index: {}]
  %s2 = inlined_call_operand.hbm [shape: f32[8,128], index: 2, kind: output, shape index: {}]
  %s3 = sld [smem:[#allocation0]]
  $region26: #{tpu_custom_call.1} parent=0
    _
  %s5 = ssub.s32 1, %s3
  %s6 = scalar_select 0, %s5, %s3
  $region1: #{tpu_custom_call.1} parent=0
    #allocation2 [shape = 'u8[2048]{0}', space=vmem, size = 0x800, scoped, tag = 'input window, operand 0, single buffered']
    #allocation3 [shape = 's32[1]{0}', space=sflag, size = 0x4, scoped, tag = 'scoped memory for tpu_custom_call.1']
    #allocation4 [shape = 's32[1]{0}', space=sflag, size = 0x4, scoped, tag = 'scoped memory for tpu_custom_call.1']
    #allocation5 [shape = 'u8[49152]{0}', space=vmem, size = 0xc000, scoped, tag = 'input window, operand 1, single buffered']
    #allocation6 [shape = 's32[1]{0}', space=sflag, size = 0x4, scoped, tag = 'scoped memory for tpu_custom_call.1']
    #allocation7 [shape = 'u8[4096]{0}', space=vmem, size = 0x1000, scoped, tag = 'output window, operand 0, single buffered']
    %7 = vsyncpa [#allocation3], 0
    %8 = vsyncpa [#allocation6], 0
    %9 = vsyncpa [#allocation4], 0
    // Predicated region
    $region2: #{tpu_custom_call.1} parent=1 // pred_check
      _
    $region3: #{tpu_custom_call.1} parent=1 // pred_check_branch
      %11 = sbr.rel (0) target = $region5
    $region4: #{tpu_custom_call.1} parent=1 // pred_region
      %s13 = ssub.s32 64, 64
      %14 = vsyncadd [#allocation3], %s13
      %s16 = sshll.u32 [#allocation2], 4
      %s17 = int_to_ptr.vmem [resolvable:$true] %s16
      %19 = dma.hbm_to_vmem [thread:$0]  %s0, 64, %s17, [#allocation3]
    $region5: #{tpu_custom_call.1} parent=1 // pred_fallthru
      _
    // Predicated region
    $region6: #{tpu_custom_call.1} parent=1 // pred_check
      _
    $region7: #{tpu_custom_call.1} parent=1 // pred_check_branch
      %21 = sbr.rel (0) target = $region9
    $region8: #{tpu_custom_call.1} parent=1 // pred_region
      %s23 = ssub.s32 1536, 1536
      %24 = vsyncadd [#allocation6], %s23
      %s25 = sshll.u32 [#allocation5], 4
      %s26 = int_to_ptr.vmem [resolvable:$true] %s25
      %31 = dma.hbm_to_vmem [thread:$0]  %s1, 1536, %s26, [#allocation6], 64, 64, 4
    $region9: #{tpu_custom_call.1} parent=1 // pred_fallthru
      _
    // Predicated region
    $region10: #{tpu_custom_call.1} parent=1 // pred_check
      _
    $region11: #{tpu_custom_call.1} parent=1 // pred_check_branch
      %33 = sbr.rel (0) target = $region13
    $region12: #{tpu_custom_call.1} parent=1 // pred_region
      %34 = dma.done [#allocation3], 64
    $region13: #{tpu_custom_call.1} parent=1 // pred_fallthru
      _
    // Predicated region
    $region14: #{tpu_custom_call.1} parent=1 // pred_check
      _
    $region15: #{tpu_custom_call.1} parent=1 // pred_check_branch
      %36 = sbr.rel (0) target = $region17
    $region16: #{tpu_custom_call.1} parent=1 // pred_region
      %37 = dma.done [#allocation6], 1536
    $region17: #{tpu_custom_call.1} parent=1 // pred_fallthru
      _
    %v39 = vld [vmem:[#allocation2] sm:$0xf]
    %v40 = vld [vmem:[#allocation5] sm:$0xf]
    %v41 = vld [vmem:[#allocation5 + $0x4] sm:$0xf]
    %v42 = vld [vmem:[#allocation5 + $0x8] sm:$0xf]
    %v43 = vld [vmem:[#allocation5 + $0xc] sm:$0xf]
    %v44 = vld [vmem:[#allocation5 + $0x10] sm:$0x1]
    %v45 = vld [vmem:[#allocation5 + $0x18] sm:$0xf]
    %v46 = vld [vmem:[#allocation5 + $0x1c] sm:$0xf]
    %v47 = vld [vmem:[#allocation5 + $0x20] sm:$0xf]
    %v48 = vld [vmem:[#allocation5 + $0x24] sm:$0xf]
    %v49 = vld [vmem:[#allocation5 + $0x28] sm:$0xf]
    %v50 = vld [vmem:[#allocation5 + $0x2c] sm:$0xf]
    %v51 = vld [vmem:[#allocation5 + $0x30] sm:$0xf]
    %v52 = vld [vmem:[#allocation5 + $0x34] sm:$0xf]
    %v53 = vld [vmem:[#allocation5 + $0x38] sm:$0xf]
    %v54 = vld [vmem:[#allocation5 + $0x3c] sm:$0xf]
    %v55 = vld [vmem:[#allocation5 + $0x40] sm:$0xf]
    %v56 = vld [vmem:[#allocation5 + $0x44] sm:$0xf]
    %v57 = vld [vmem:[#allocation5 + $0x48] sm:$0xf]
    %v58 = vld [vmem:[#allocation5 + $0x4c] sm:$0xf]
    %v59 = vld [vmem:[#allocation5 + $0x50] sm:$0xf]
    %v60 = vld [vmem:[#allocation5 + $0x54] sm:$0xf]
    %v61 = vld [vmem:[#allocation5 + $0x58] sm:$0x1]
    %v62 = vunpack.c.l.bf16 %v44
    %v63 = vlaneseq
    %v64 = vshrl.u32 %v63, 7
    %v65 = vsub.s32 0, %v64
    %v66 = vrot.slane %v62, %v65
    %v71 = vunpack.c.l.b16 %v40
    %v72 = vunpack.c.l.b16 %v41
    %v73 = vunpack.c.l.b16 %v42
    %v74 = vunpack.c.l.b16 %v43
    %v75 = vpack.c.b16 %v72, %v71
    %v76 = vpack.c.b16 %v74, %v73
    %vm79 = vcmask 261120
    %v81 = vsel %vm79, %v39, 0
    %83 = vmatprep.subr.bf16.mxu0 0
    %84 = vmatpush1.bf16.msra.mxu0 %v75
    %85 = vmatprep.subr.bf16.mxu0 0
    %86 = vmatpush1.bf16.msra.mxu0 %v76
    %87 = vmatprep.subr.bf16.mxu0 0
    %88 = vmatpush1.bf16.msra.mxu0 0
    %89 = vmatprep.subr.bf16.mxu0 0
    %90 = vmatpush1.bf16.msra.mxu0 0
    %91 = vmatprep.subr.bf16.mxu0 0
    %92 = vmatpush1.bf16.msra.mxu0 0
    %93 = vmatprep.subr.bf16.mxu0 0
    %94 = vmatpush1.bf16.msra.mxu0 0
    %95 = vmatprep.subr.bf16.mxu0 0
    %96 = vmatpush1.bf16.msra.mxu0 0
    %97 = vmatprep.subr.bf16.mxu0 0
    %98 = vmatpush1.bf16.msra.mxu0 0
    %99 = vmatprep.subr.bf16.mxu0 0
    %100 = vmatpush1.bf16.msra.mxu0 0
    %101 = vmatprep.subr.bf16.mxu0 0
    %102 = vmatpush1.bf16.msra.mxu0 0
    %103 = vmatprep.subr.bf16.mxu0 0
    %104 = vmatpush1.bf16.msra.mxu0 0
    %105 = vmatprep.subr.bf16.mxu0 0
    %106 = vmatpush1.bf16.msra.mxu0 0
    %107 = vmatprep.subr.bf16.mxu0 0
    %108 = vmatpush1.bf16.msra.mxu0 0
    %109 = vmatprep.subr.bf16.mxu0 0
    %110 = vmatpush1.bf16.msra.mxu0 0
    %111 = vmatprep.subr.bf16.mxu0 0
    %112 = vmatpush1.bf16.msra.mxu0 0
    %113 = vmatprep.subr.bf16.mxu0 0
    %114 = vmatpush1.bf16.msra.mxu0 0
    %115 = vmatprep.mubr.bf16.mxu0 0
    %116 = vmatmul.mubr.bf16.gmra.mrb[0].mxu0 %v81
    %v117 = vpop.f32.mrb[0].mxu0
    %v118 = vadd.f32 %v66, %v117
    %v119 = vpop.f32.mrb[0].mxu0
    %v120 = vpop.f32.mrb[0].mxu0
    %v121 = vpop.f32.mrb[0].mxu0
    %122 = vdwg.mxu0
    %v123 = vmax.f32 %v118, 0.0
    %v124 = vpack.c.bf16 %v123, %v123
    %v125 = vunpack.c.l.bf16 %v61
    %v126 = vlaneseq
    %v127 = vshrl.u32 %v126, 7
    %v128 = vsub.s32 0, %v127
    %v129 = vrot.slane %v125, %v128
    %v146 = vunpack.c.l.b16 %v45
    %v147 = vunpack.c.l.b16 %v46
    %v148 = vunpack.c.l.b16 %v47
    %v149 = vunpack.c.l.b16 %v48
    %v150 = vunpack.c.l.b16 %v49
    %v151 = vunpack.c.l.b16 %v50
    %v152 = vunpack.c.l.b16 %v51
    %v153 = vunpack.c.l.b16 %v52
    %v154 = vunpack.c.l.b16 %v53
    %v155 = vunpack.c.l.b16 %v54
    %v156 = vunpack.c.l.b16 %v55
    %v157 = vunpack.c.l.b16 %v56
    %v158 = vunpack.c.l.b16 %v57
    %v159 = vunpack.c.l.b16 %v58
    %v160 = vunpack.c.l.b16 %v59
    %v161 = vunpack.c.l.b16 %v60
    %v162 = vpack.c.b16 %v147, %v146
    %v163 = vpack.c.b16 %v149, %v148
    %v164 = vpack.c.b16 %v151, %v150
    %v165 = vpack.c.b16 %v153, %v152
    %v166 = vpack.c.b16 %v155, %v154
    %v167 = vpack.c.b16 %v157, %v156
    %v168 = vpack.c.b16 %v159, %v158
    %v169 = vpack.c.b16 %v161, %v160
    %178 = vmatprep.subr.bf16.mxu0 0
    %179 = vmatpush1.bf16.msra.mxu0 %v162
    %180 = vmatprep.subr.bf16.mxu0 0
    %181 = vmatpush1.bf16.msra.mxu0 %v163
    %182 = vmatprep.subr.bf16.mxu0 0
    %183 = vmatpush1.bf16.msra.mxu0 %v164
    %184 = vmatprep.subr.bf16.mxu0 0
    %185 = vmatpush1.bf16.msra.mxu0 %v165
    %186 = vmatprep.subr.bf16.mxu0 0
    %187 = vmatpush1.bf16.msra.mxu0 %v166
    %188 = vmatprep.subr.bf16.mxu0 0
    %189 = vmatpush1.bf16.msra.mxu0 %v167
    %190 = vmatprep.subr.bf16.mxu0 0
    %191 = vmatpush1.bf16.msra.mxu0 %v168
    %192 = vmatprep.subr.bf16.mxu0 0
    %193 = vmatpush1.bf16.msra.mxu0 %v169
    %194 = vmatprep.subr.bf16.mxu0 0
    %195 = vmatpush1.bf16.msra.mxu0 0
    %196 = vmatprep.subr.bf16.mxu0 0
    %197 = vmatpush1.bf16.msra.mxu0 0
    %198 = vmatprep.subr.bf16.mxu0 0
    %199 = vmatpush1.bf16.msra.mxu0 0
    %200 = vmatprep.subr.bf16.mxu0 0
    %201 = vmatpush1.bf16.msra.mxu0 0
    %202 = vmatprep.subr.bf16.mxu0 0
    %203 = vmatpush1.bf16.msra.mxu0 0
    %204 = vmatprep.subr.bf16.mxu0 0
    %205 = vmatpush1.bf16.msra.mxu0 0
    %206 = vmatprep.subr.bf16.mxu0 0
    %207 = vmatpush1.bf16.msra.mxu0 0
    %208 = vmatprep.subr.bf16.mxu0 0
    %209 = vmatpush1.bf16.msra.mxu0 0
    %210 = vmatprep.mubr.bf16.mxu0 0
    %211 = vmatmul.mubr.bf16.gmra.mrb[0].mxu0 %v124
    %v212 = vpop.f32.mrb[0].mxu0
    %v213 = vadd.f32 %v129, %v212
    %v214 = vpop.f32.mrb[0].mxu0
    %v215 = vpop.f32.mrb[0].mxu0
    %v216 = vpop.f32.mrb[0].mxu0
    %217 = vdwg.mxu0
    %218 = vst [vmem:[#allocation7] sm:$0xff] %v213
    // Predicated region
    $region18: #{tpu_custom_call.1} parent=1 // pred_check
      _
    $region19: #{tpu_custom_call.1} parent=1 // pred_check_branch
      %220 = sbr.rel (0) target = $region21
    $region20: #{tpu_custom_call.1} parent=1 // pred_region
      %s222 = ssub.s32 128, 128
      %223 = vsyncadd [#allocation4], %s222
      %s225 = sshll.u32 [#allocation7], 4
      %s226 = int_to_ptr.vmem [resolvable:$true] %s225
      %228 = dma.vmem_to_hbm [thread:$0]  %s226, 128, %s2, [#allocation4]
    $region21: #{tpu_custom_call.1} parent=1 // pred_fallthru
      _
    // Predicated region
    $region22: #{tpu_custom_call.1} parent=1 // pred_check
      _
    $region23: #{tpu_custom_call.1} parent=1 // pred_check_branch
      %230 = sbr.rel (0) target = $region25
    $region24: #{tpu_custom_call.1} parent=1 // pred_region
      %231 = dma.done [#allocation4], 128
    $region25: #{tpu_custom_call.1} parent=1 // pred_fallthru
      _
    %232 = vsyncpa [#allocation3], 1
    %233 = vsyncpa [#allocation6], 1
    %234 = vsyncpa [#allocation4], 1

</llo_original>
